<compile_context>
chip_gen: v7x
topology: tpu7x:2x2x1
jax: 0.10.0
libtpu: 0.0.40
codegen_flags: <defaults>
</compile_context>

<pallas_src>
import jax
import jax.numpy as jnp
from jax.experimental import pallas as pl
from jax.experimental.pallas import tpu as pltpu


# ----------------------------------------------------------------------------
# Helpers
# ----------------------------------------------------------------------------
def _round_up(v, m):
    return ((v + m - 1) // m) * m


def _tpu_vmem_capacity_bytes():
    try:
        return int(pltpu.get_tpu_info().vmem_capacity_bytes)
    except Exception:
        return 64 << 20  # conservative fallback (v7x per-TC physical VMEM)


def _tpu_num_tensorcores():
    # Only used to decide whether to split N for megacore; fails safe to 1.
    try:
        info = pltpu.get_tpu_info()
        for attr in ("num_tensorcores", "tensorcores_per_chip", "num_cores"):
            v = getattr(info, attr, None)
            if v:
                return int(v)
    except Exception:
        pass
    return 1


def _spec(block_shape, index_map, *, single_buffer=False):
    # Single-buffer blocks whose index never changes across the grid
    # (default double-buffering would waste VMEM on a second identical copy).
    if single_buffer:
        return pl.BlockSpec(block_shape, index_map, pipeline_mode=pl.Buffered(1))
    return pl.BlockSpec(block_shape, index_map)


# ----------------------------------------------------------------------------
# Kernels
# ----------------------------------------------------------------------------
def _linear_relu_kernel(x_ref, w_ref, b_ref, o_ref):
    """Un-split K: one MXU matmul per (tm, tn) tile, fused bias + ReLU."""
    acc = jnp.dot(x_ref[...], w_ref[...], preferred_element_type=jnp.float32)
    o_ref[...] = jnp.maximum(acc + b_ref[...], 0.0).astype(o_ref.dtype)


def _linear_relu_ksplit_kernel(x_ref, w_ref, b_ref, o_ref, acc_ref):
    """K reduced over the last ('arbitrary') grid axis with an f32 accumulator."""
    k = pl.program_id(2)

    @pl.when(k == 0)
    def _():
        acc_ref[...] = jnp.zeros_like(acc_ref)

    acc_ref[...] += jnp.dot(x_ref[...], w_ref[...],
                            preferred_element_type=jnp.float32)

    @pl.when(k == pl.num_programs(2) - 1)
    def _():
        o_ref[...] = jnp.maximum(acc_ref[...] + b_ref[...], 0.0).astype(o_ref.dtype)


# ----------------------------------------------------------------------------
# Parameter prep (done ONCE, at init time — never per forward call)
# ----------------------------------------------------------------------------
def prepare_relu_layer_params(weight, bias):
    """PyTorch layout (out_features, in_features) -> kernel layout.

    Returns:
      w_kn:  (in_features, out_features)  -- MXU-friendly, no per-tile transpose
      b_2d:  (1, out_features)            -- broadcastable over the batch rows
    """
    # TODO(synk): if numerics allow, cast the weight to bf16 here to halve HBM
    # traffic and double the MXU rate on v6e/v7x (keep f32 accumulation).
    w_kn = jnp.asarray(weight).T
    b_2d = jnp.asarray(bias).reshape(1, -1)
    return w_kn, b_2d


# ----------------------------------------------------------------------------
# Tile selection
# ----------------------------------------------------------------------------
def _choose_tiles(M, K, N, in_itemsize, out_itemsize, vmem_budget, n_cores):
    # ---- N (lane) tiling: never pad at call time -------------------------
    if N % 128 == 0:
        tn = min(512, N)
        # Megacore (v7x): split N, not M, so each TensorCore streams a
        # disjoint slice of the weight instead of duplicating the whole read.
        if n_cores >= 2 and N >= 256 and N // tn < 2:
            tn = max(128, (N // 2 // 128) * 128)
    else:
        # Full-dim block is exempt from the 128-divisibility rule.
        tn = N
        # TODO(synk): for very large non-128-aligned out_features, pad the
        # (K, N) weight/bias once at init time instead of using a full block.

    # ---- M (sublane) tiling; dtype-aware minimum sublane tile -------------
    sublane = {4: 8, 2: 16, 1: 32}.get(in_itemsize, 8)
    if M <= 512:
        tm = M                      # full-dim block: exempt from sublane rule
    else:
        tm = _round_up(512, sublane)

    # ---- K tiling: keep K un-split whenever the full-K blocks fit in VMEM -
    no_split_bytes = (2 * (tm * K + K * tn + tn) * in_itemsize
                      + 2 * tm * tn * out_itemsize)
    if no_split_bytes <= vmem_budget // 2:
        tk = K
    else:
        tk = None
        for cand in (2048, 1024, 512, 256, 128):
            if K % cand == 0:
                tk = cand
                break
        if tk is None:
            # TODO(synk): huge, non-128-aligned K; falls back to un-split K.
            tk = K
    return tm, tn, tk


# ----------------------------------------------------------------------------
# Forward
# ----------------------------------------------------------------------------
def relu_layer(x, w_kn, b_2d):
    """relu(x @ w_kn + b_2d) == relu(x @ weight.T + bias) for the PyTorch module.

    x:    (B, in_features)
    w_kn: (in_features, out_features)   -- from prepare_relu_layer_params
    b_2d: (1, out_features)
    """
    M, K = x.shape
    Kw, N = w_kn.shape
    assert K == Kw, (K, Kw)
    assert b_2d.shape == (1, N), b_2d.shape

    in_itemsize = jnp.dtype(x.dtype).itemsize
    out_itemsize = in_itemsize

    vmem_cap = _tpu_vmem_capacity_bytes()
    vmem_limit = int(min(100 << 20, (vmem_cap * 3) // 4))
    n_cores = _tpu_num_tensorcores()

    tm, tn, tk = _choose_tiles(M, K, N, in_itemsize, out_itemsize,
                               vmem_limit, n_cores)
    gm = pl.cdiv(M, tm)
    gn = pl.cdiv(N, tn)
    gk = pl.cdiv(K, tk)

    if gk == 1:
        # ---- un-split K: grid (j, i); weight streamed from HBM exactly once.
        cost = pl.CostEstimate(
            flops=int(2 * gm * tm * gn * tn * K),
            transcendentals=0,
            bytes_accessed=int(gn * M * K * in_itemsize      # x, re-read per j
                               + K * N * in_itemsize         # weight, once
                               + N * in_itemsize             # bias
                               + M * N * out_itemsize))      # output
        return pl.pallas_call(
            _linear_relu_kernel,
            out_shape=jax.ShapeDtypeStruct((M, N), x.dtype),
            grid_spec=pltpu.PrefetchScalarGridSpec(
                num_scalar_prefetch=0,
                grid=(gn, gm),
                in_specs=[
                    _spec((tm, K), lambda j, i: (i, 0), single_buffer=(gm == 1)),
                    _spec((K, tn), lambda j, i: (0, j), single_buffer=(gn == 1)),
                    _spec((1, tn), lambda j, i: (0, j), single_buffer=(gn == 1)),
                ],
                out_specs=pl.BlockSpec((tm, tn), lambda j, i: (i, j)),
            ),
            compiler_params=pltpu.CompilerParams(
                dimension_semantics=("parallel", "parallel"),
                vmem_limit_bytes=vmem_limit),
            cost_estimate=cost,
        )(x, w_kn, b_2d)

    # ---- large K: reduce over the trailing 'arbitrary' axis with an f32 acc.
    cost = pl.CostEstimate(
        flops=int(2 * gm * tm * gn * tn * gk * tk),
        transcendentals=0,
        bytes_accessed=int(gn * M * K * in_itemsize          # x, re-read per j
                           + gm * K * N * in_itemsize        # weight, per i
                           + N * in_itemsize
                           + M * N * out_itemsize))
    return pl.pallas_call(
        _linear_relu_ksplit_kernel,
        out_shape=jax.ShapeDtypeStruct((M, N), x.dtype),
        grid_spec=pltpu.PrefetchScalarGridSpec(
            num_scalar_prefetch=0,
            grid=(gn, gm, gk),
            in_specs=[
                pl.BlockSpec((tm, tk), lambda j, i, k: (i, k)),
                pl.BlockSpec((tk, tn), lambda j, i, k: (k, j)),
                _spec((1, tn), lambda j, i, k: (0, j), single_buffer=(gn == 1)),
            ],
            out_specs=pl.BlockSpec((tm, tn), lambda j, i, k: (i, j)),
            scratch_shapes=[pltpu.VMEM((tm, tn), jnp.float32)],
        ),
        compiler_params=pltpu.CompilerParams(
            dimension_semantics=("parallel", "parallel", "arbitrary"),
            vmem_limit_bytes=vmem_limit),
        cost_estimate=cost,
    )(x, w_kn, b_2d)


# ----------------------------------------------------------------------------
# Demo / self-check
# ----------------------------------------------------------------------------
if __name__ == "__main__":
    key = jax.random.PRNGKey(0)
    fwd = jax.jit(relu_layer)

    def run_case(key, B, IN, OUT):
        kx, kw, kb = jax.random.split(key, 3)
        x = jax.random.normal(kx, (B, IN), dtype=jnp.float32)
        # PyTorch nn.Linear shapes: weight (out, in), bias (out,)
        bound = 1.0 / (IN ** 0.5)
        weight = jax.random.uniform(kw, (OUT, IN), dtype=jnp.float32,
                                    minval=-bound, maxval=bound)
        bias = jax.random.uniform(kb, (OUT,), dtype=jnp.float32,
                                  minval=-bound, maxval=bound)

        # One-time parameter layout (amortized across all forward calls).
        w_kn, b_2d = prepare_relu_layer_params(weight, bias)

        out = jax.block_until_ready(fwd(x, w_kn, b_2d))
        ref = jnp.maximum(x @ weight.T + bias, 0.0)
        assert out.shape == (B, OUT), out.shape
        assert jnp.allclose(out, ref, atol=1e-5, rtol=1e-5)

    k1, k2 = jax.random.split(key)
    # Small shapes consistent with the module: batch=16, in=32, out=64
    # (single grid step, full-array blocks, zero padding).
    run_case(k1, B=16, IN=32, OUT=64)
    # Slightly larger case that exercises 128-aligned N tiling.
    run_case(k2, B=8, IN=128, OUT=256)

    print("KERNEL_OK")
</pallas_src>

<mosaic_0001>
module attributes {stable_mosaic.version = 11 : i64} {
  func.func @_linear_relu_kernel(%arg0: i32, %arg1: i32, %arg2: memref<16x32xf32, #tpu.memory_space<vmem>>, %arg3: memref<32x64xf32, #tpu.memory_space<vmem>>, %arg4: memref<1x64xf32, #tpu.memory_space<vmem>>, %arg5: memref<16x64xf32, #tpu.memory_space<vmem>>) attributes {dimension_semantics = [#tpu.dimension_semantics<parallel>, #tpu.dimension_semantics<parallel>], iteration_bounds = array<i64: 1, 1>, scalar_prefetch = 0 : i64, scratch_operands = 0 : i64, tpu.core_type = #tpu.core_type<tc>, window_params = [{pipeline_mode = #tpu.pipeline_mode<synchronous>, transform_indices = @transform_0, window_bounds = array<i64: 16, 32>}, {pipeline_mode = #tpu.pipeline_mode<synchronous>, transform_indices = @transform_1, window_bounds = array<i64: 32, 64>}, {pipeline_mode = #tpu.pipeline_mode<synchronous>, transform_indices = @transform_2, window_bounds = array<i64: 1, 64>}, {transform_indices = @transform_3, window_bounds = array<i64: 16, 64>}]} {
    %c0 = arith.constant 0 : index
    %c0_0 = arith.constant 0 : index
    %0 = vector.load %arg2[%c0, %c0_0] : memref<16x32xf32, #tpu.memory_space<vmem>>, vector<16x32xf32>
    %c0_1 = arith.constant 0 : index
    %c0_2 = arith.constant 0 : index
    %1 = vector.load %arg3[%c0_1, %c0_2] : memref<32x64xf32, #tpu.memory_space<vmem>>, vector<32x64xf32>
    %cst = arith.constant dense<0.000000e+00> : vector<16x64xf32>
    %2 = tpu.matmul %0, %1, %cst {dimension_numbers = #tpu.dot_dimension_numbers<[1], [0], [0], [1], [0, 0, 1, 1], [], []>} : vector<16x32xf32>, vector<32x64xf32>, vector<16x64xf32> -> vector<16x64xf32>
    %c0_3 = arith.constant 0 : index
    %c0_4 = arith.constant 0 : index
    %3 = vector.load %arg4[%c0_3, %c0_4] : memref<1x64xf32, #tpu.memory_space<vmem>>, vector<1x64xf32>
    %4 = vector.broadcast %3 : vector<1x64xf32> to vector<16x64xf32>
    %5 = arith.addf %2, %4 : vector<16x64xf32>
    %cst_5 = arith.constant 0.000000e+00 : f32
    %6 = vector.broadcast %cst_5 : f32 to vector<16x64xf32>
    %7 = arith.maximumf %5, %6 : vector<16x64xf32>
    %c0_6 = arith.constant 0 : index
    %c0_7 = arith.constant 0 : index
    %8 = vector.load %arg5[%c0_6, %c0_7] : memref<16x64xf32, #tpu.memory_space<vmem>>, vector<16x64xf32>
    tpu.vector_store %arg5[%c0_6, %c0_7], %7 {strides = array<i32>} : memref<16x64xf32, #tpu.memory_space<vmem>>, vector<16x64xf32>,
    return
  }
  func.func @transform_0(%arg0: i32, %arg1: i32) -> (i32, i32) {
    %c0_i32 = arith.constant 0 : i32
    %c0_i32_0 = arith.constant 0 : i32
    return %arg1, %c0_i32 : i32, i32
  }
  func.func @transform_1(%arg0: i32, %arg1: i32) -> (i32, i32) {
    %c0_i32 = arith.constant 0 : i32
    %c0_i32_0 = arith.constant 0 : i32
    return %c0_i32, %arg0 : i32, i32
  }
  func.func @transform_2(%arg0: i32, %arg1: i32) -> (i32, i32) {
    %c0_i32 = arith.constant 0 : i32
    %c0_i32_0 = arith.constant 0 : i32
    return %c0_i32, %arg0 : i32, i32
  }
  func.func @transform_3(%arg0: i32, %arg1: i32) -> (i32, i32) {
    %c0_i32 = arith.constant 0 : i32
    return %arg1, %arg0 : i32, i32
  }
}

</mosaic_0001>

<llo_original>
// kernel: relu_layer.1
$region0: #{relu_layer.1}
  #allocation0 [shape = 'u32[]', space=smem, size = 0x4, offset = 0x4, fixed_abs, tag = 'smem constant byte address 0x4 - core index']
  #allocation1 [shape = 'u32[144,128]{1,0:T(1,128)}', space=vmem, size = 0x12000, scoped, tag = 'internal scratch']
  %s0 = inlined_call_operand.hbm [shape: f32[16,32], index: 0, kind: input, shape index: {}]
  %s1 = inlined_call_operand.hbm [shape: f32[32,64], index: 1, kind: input, shape index: {}]
  %s2 = inlined_call_operand.vmem [shape: f32[1,64], index: 2, kind: input, shape index: {}]
  %s3 = inlined_call_operand.hbm [shape: f32[16,64], index: 3, kind: output, shape index: {}]
  %s4 = sld [smem:[#allocation0]]
  $region30: #{relu_layer.1} parent=0
    _
  %s6 = ssub.s32 1, %s4
  %s7 = scalar_select 0, %s6, %s4
  $region1: #{relu_layer.1} parent=0
    #allocation2 [shape = 'u8[8192]{0}', space=vmem, size = 0x2000, scoped, tag = 'input window, operand 0, single buffered']
    #allocation3 [shape = 's32[1]{0}', space=sflag, size = 0x4, scoped, tag = 'scoped memory for relu_layer.1']
    #allocation4 [shape = 's32[1]{0}', space=sflag, size = 0x4, scoped, tag = 'scoped memory for relu_layer.1']
    #allocation5 [shape = 'u8[16384]{0}', space=vmem, size = 0x4000, scoped, tag = 'input window, operand 1, single buffered']
    #allocation6 [shape = 's32[1]{0}', space=sflag, size = 0x4, scoped, tag = 'scoped memory for relu_layer.1']
    #allocation7 [shape = 'u8[8192]{0}', space=vmem, size = 0x2000, scoped, tag = 'output window, operand 0, single buffered']
    %8 = vsyncpa [#allocation3], 0
    %9 = vsyncpa [#allocation6], 0
    %10 = vsyncpa [#allocation4], 0
    // Predicated region
    $region2: #{relu_layer.1} parent=1 // pred_check
      _
    $region3: #{relu_layer.1} parent=1 // pred_check_branch
      %12 = sbr.rel (0) target = $region5
    $region4: #{relu_layer.1} parent=1 // pred_region
      %s14 = ssub.s32 256, 256
      %15 = vsyncadd [#allocation3], %s14
      %s16 = sshll.u32 [#allocation2], 4
      %s17 = int_to_ptr.vmem [resolvable:$true] %s16
      %22 = dma.hbm_to_vmem [thread:$0]  %s0, 256, %s17, [#allocation3], 128, 128, 8
    $region5: #{relu_layer.1} parent=1 // pred_fallthru
      _
    // Predicated region
    $region6: #{relu_layer.1} parent=1 // pred_check
      _
    $region7: #{relu_layer.1} parent=1 // pred_check_branch
      %24 = sbr.rel (0) target = $region9
    $region8: #{relu_layer.1} parent=1 // pred_region
      %s26 = ssub.s32 512, 512
      %27 = vsyncadd [#allocation6], %s26
      %s28 = sshll.u32 [#allocation5], 4
      %s29 = int_to_ptr.vmem [resolvable:$true] %s28
      %34 = dma.hbm_to_vmem [thread:$0]  %s1, 512, %s29, [#allocation6], 128, 128, 8
    $region9: #{relu_layer.1} parent=1 // pred_fallthru
      _
    // Predicated region
    $region10: #{relu_layer.1} parent=1 // pred_check
      _
    $region11: #{relu_layer.1} parent=1 // pred_check_branch
      %36 = sbr.rel (0) target = $region13
    $region12: #{relu_layer.1} parent=1 // pred_region
      _
    $region13: #{relu_layer.1} parent=1 // pred_fallthru
      _
    // Predicated region
    $region14: #{relu_layer.1} parent=1 // pred_check
      _
    $region15: #{relu_layer.1} parent=1 // pred_check_branch
      %38 = sbr.rel (0) target = $region17
    $region16: #{relu_layer.1} parent=1 // pred_region
      %39 = dma.done [#allocation3], 256
    $region17: #{relu_layer.1} parent=1 // pred_fallthru
      _
    // Predicated region
    $region18: #{relu_layer.1} parent=1 // pred_check
      _
    $region19: #{relu_layer.1} parent=1 // pred_check_branch
      %41 = sbr.rel (0) target = $region21
    $region20: #{relu_layer.1} parent=1 // pred_region
      %42 = dma.done [#allocation6], 512
    $region21: #{relu_layer.1} parent=1 // pred_fallthru
      _
    %v43 = vld [vmem:[#allocation2] sm:$0xff]
    %v44 = vld [vmem:[#allocation2 + $0x8] sm:$0xff]
    %v45 = vld [vmem:[#allocation5] sm:$0xff]
    %v46 = vld [vmem:[#allocation5 + $0x8] sm:$0xff]
    %v47 = vld [vmem:[#allocation5 + $0x10] sm:$0xff]
    %v48 = vld [vmem:[#allocation5 + $0x18] sm:$0xff]
    %v49 = vld [vmem:[%s2] sm:$0x1]
    %v51 = vlaneseq
    %v52 = vshrl.u32 %v51, 7
    %v53 = vsub.s32 0, %v52
    %v54 = vrot.slane %v49, %v53
    %vm56 = vcmask 261120
    %v58 = vsel %vm56, %v43, 0
    %v61 = vsel %vm56, %v44, 0
    %63 = vmatprep.subr.mxu0 0.0
    %64 = vmatpush1.msra.mxu0 %v45
    %65 = vmatprep.subr.mxu0 0.0
    %66 = vmatpush1.msra.mxu0 %v46
    %67 = vmatprep.subr.mxu0 0.0
    %68 = vmatpush1.msra.mxu0 %v47
    %69 = vmatprep.subr.mxu0 0.0
    %70 = vmatpush1.msra.mxu0 %v48
    %71 = vmatprep.subr.mxu0 0.0
    %72 = vmatpush1.msra.mxu0 0.0
    %73 = vmatprep.subr.mxu0 0.0
    %74 = vmatpush1.msra.mxu0 0.0
    %75 = vmatprep.subr.mxu0 0.0
    %76 = vmatpush1.msra.mxu0 0.0
    %77 = vmatprep.subr.mxu0 0.0
    %78 = vmatpush1.msra.mxu0 0.0
    %79 = vmatprep.subr.mxu0 0.0
    %80 = vmatpush1.msra.mxu0 0.0
    %81 = vmatprep.subr.mxu0 0.0
    %82 = vmatpush1.msra.mxu0 0.0
    %83 = vmatprep.subr.mxu0 0.0
    %84 = vmatpush1.msra.mxu0 0.0
    %85 = vmatprep.subr.mxu0 0.0
    %86 = vmatpush1.msra.mxu0 0.0
    %87 = vmatprep.subr.mxu0 0.0
    %88 = vmatpush1.msra.mxu0 0.0
    %89 = vmatprep.subr.mxu0 0.0
    %90 = vmatpush1.msra.mxu0 0.0
    %91 = vmatprep.subr.mxu0 0.0
    %92 = vmatpush1.msra.mxu0 0.0
    %93 = vmatprep.subr.mxu0 0.0
    %94 = vmatpush1.msra.mxu0 0.0
    %95 = vmatprep.subr.mxu0 0.0
    %96 = vmatpush1.msra.mxu0 0.0
    %97 = vmatprep.subr.mxu0 0.0
    %98 = vmatpush1.msra.mxu0 0.0
    %99 = vmatprep.subr.mxu0 0.0
    %100 = vmatpush1.msra.mxu0 0.0
    %101 = vmatprep.subr.mxu0 0.0
    %102 = vmatpush1.msra.mxu0 0.0
    %103 = vmatprep.subr.mxu0 0.0
    %104 = vmatpush1.msra.mxu0 0.0
    %105 = vmatprep.subr.mxu0 0.0
    %106 = vmatpush1.msra.mxu0 0.0
    %107 = vmatprep.subr.mxu0 0.0
    %108 = vmatpush1.msra.mxu0 0.0
    %109 = vmatprep.subr.mxu0 0.0
    %110 = vmatpush1.msra.mxu0 0.0
    %111 = vmatprep.subr.mxu0 0.0
    %112 = vmatpush1.msra.mxu0 0.0
    %113 = vmatprep.subr.mxu0 0.0
    %114 = vmatpush1.msra.mxu0 0.0
    %115 = vmatprep.subr.mxu0 0.0
    %116 = vmatpush1.msra.mxu0 0.0
    %117 = vmatprep.subr.mxu0 0.0
    %118 = vmatpush1.msra.mxu0 0.0
    %119 = vmatprep.subr.mxu0 0.0
    %120 = vmatpush1.msra.mxu0 0.0
    %121 = vmatprep.subr.mxu0 0.0
    %122 = vmatpush1.msra.mxu0 0.0
    %123 = vmatprep.subr.mxu0 0.0
    %124 = vmatpush1.msra.mxu0 0.0
    %125 = vmatprep.subr.mxu0 0.0
    %126 = vmatpush1.msra.mxu0 0.0
    %127 = vmatprep.mubr.f32.mxu0 0.0
    %128 = vmatmul.mubr.f32.gmra.mrb[0].mxu0 %v58
    %v129 = vpop.f32.mrb[0].mxu0
    %v130 = vadd.f32 %v54, %v129
    %v131 = vpop.f32.mrb[0].mxu0
    %132 = vmatprep.mubr.f32.mxu0 0.0
    %133 = vmatmul.mubr.f32.gmra.mrb[0].mxu0 %v61
    %v134 = vpop.f32.mrb[0].mxu0
    %v135 = vadd.f32 %v54, %v134
    %v136 = vpop.f32.mrb[0].mxu0
    %137 = vdwg.mxu0
    %v138 = vmax.f32 %v130, 0.0
    %v139 = vmax.f32 %v135, 0.0
    %vm140 = vcmask 523264
    %141 = vst.msk [vmem:[#allocation7] sm:$0xff] %vm140, %v138
    %142 = vst.msk [vmem:[#allocation7 + $0x8] sm:$0xff] %vm140, %v139
    // Predicated region
    $region22: #{relu_layer.1} parent=1 // pred_check
      _
    $region23: #{relu_layer.1} parent=1 // pred_check_branch
      %144 = sbr.rel (0) target = $region25
    $region24: #{relu_layer.1} parent=1 // pred_region
      %s146 = ssub.s32 256, 256
      %147 = vsyncadd [#allocation4], %s146
      %s148 = sshll.u32 [#allocation7], 4
      %s149 = int_to_ptr.vmem [resolvable:$true] %s148
      %154 = dma.vmem_to_hbm [thread:$0]  %s149, 256, %s3, [#allocation4], 128, 128, 8
    $region25: #{relu_layer.1} parent=1 // pred_fallthru
      _
    // Predicated region
    $region26: #{relu_layer.1} parent=1 // pred_check
      _
    $region27: #{relu_layer.1} parent=1 // pred_check_branch
      %156 = sbr.rel (0) target = $region29
    $region28: #{relu_layer.1} parent=1 // pred_region
      %157 = dma.done [#allocation4], 256
    $region29: #{relu_layer.1} parent=1 // pred_fallthru
      _
    %158 = vsyncpa [#allocation3], 1
    %159 = vsyncpa [#allocation6], 1
    %160 = vsyncpa [#allocation4], 1

</llo_original>
